<compile_context>
chip_gen: v5e
topology: v5e:2x2
jax: 0.10.0
libtpu: 0.0.40
codegen_flags: <defaults>
</compile_context>

<pallas_src>
import functools

import jax
import jax.numpy as jnp
from jax.experimental import pallas as pl
from jax.experimental.pallas import tpu as pltpu

_EPS = 1e-6  # PyTorch PairwiseDistance default eps


def _contrastive_kernel(out0_ref, out1_ref, gt_ref, loss_ref, *, k, feat, margin):
    # Cast the *loaded tile* (not the HBM array) to f32: native-dtype streaming
    # through HBM, f32 accumulation of the squared sum.
    x0 = out0_ref[...].astype(jnp.float32)                 # (TB, k*feat)
    x1 = out1_ref[...].astype(jnp.float32)                 # (TB, k*feat)
    diff = x0 - x1 + _EPS                                   # VPU
    sq = diff * diff
    if k == 1:
        d2 = jnp.sum(sq, axis=-1, keepdims=True)            # (TB, 1) XLU lane reduce
    else:
        # Segmented lane reduce: k groups of `feat` lanes -> (TB, k).
        d2 = jnp.concatenate(
            [jnp.sum(sq[:, j * feat:(j + 1) * feat], axis=-1, keepdims=True)
             for j in range(k)],
            axis=-1)
    d = jnp.sqrt(d2)                                         # EUP, only feeds hinge
    gt = gt_ref[...]                                         # (TB, k) f32
    hinge = jnp.maximum(margin - d, 0.0)
    loss_ref[...] = (1.0 - gt) * 0.5 * d2 + gt * 0.5 * (hinge * hinge)


def _contrastive_jnp(out0, out1, label, margin=0.5):
    """Pure-jnp reference / small-shape fallback (XLA fuses this)."""
    gt = label.astype(jnp.float32)
    diff = out0.astype(jnp.float32) - out1.astype(jnp.float32) + _EPS
    d2 = jnp.sum(diff * diff, axis=-1)
    d = jnp.sqrt(d2)
    return (1.0 - gt) * 0.5 * d2 + gt * 0.5 * jnp.square(jnp.maximum(margin - d, 0.0))


def _vmem_capacity_bytes():
    try:
        cap = getattr(pltpu.get_tpu_info(), "vmem_capacity_bytes", None)
        if cap:
            return int(cap)
    except Exception:
        pass
    return 64 * 1024 * 1024  # conservative default (v7x per-TensorCore VMEM)


def contrastive_loss(out0, out1, label, margin=0.5, *, force_pallas=False,
                     block_rows=None):
    """Pallas implementation of ContrastiveLoss.forward (per-sample loss, shape (B,))."""
    assert out0.shape == out1.shape and out0.ndim == 2
    B, F = out0.shape
    itemsize = jnp.dtype(out0.dtype).itemsize

    # Tiny problems: a one-tile grid is dominated by fixed launch/pipeline overhead.
    if not force_pallas and 2 * B * F * itemsize < 256 * 1024:
        return _contrastive_jnp(out0, out1, label, margin)

    # Lane packing for small feature dims (restore full 128-lane occupancy).
    if 8 <= F < 128 and 128 % F == 0 and B % (128 // F) == 0:
        k = 128 // F
    else:
        k = 1
    rows, Fp = B // k, k * F

    # ---- generation-aware tile sizing ---------------------------------------
    vmem_cap = _vmem_capacity_bytes()                        # 64 MiB v7x / 128 MiB v5e,v6e
    vmem_limit = min((vmem_cap * 3) // 4, 100 * 1024 * 1024)
    budget = vmem_limit - 8 * 1024 * 1024                    # headroom for compiler scratch
    # Per-row VMEM: both input tiles + label/loss columns (padded to 128 lanes, f32).
    per_row = 2 * Fp * itemsize + 2 * 128 * 4
    tb_vmem = budget // (2 * per_row)                        # 2 pipeline buffers of everything
    tb_target = (4 * 1024 * 1024) // (Fp * itemsize)         # ~4 MiB per input per grid step
    if tb_vmem < 8:
        # TODO(synk): add a feature-axis reduction grid for F so large that even 8 rows
        # exceed the VMEM budget; fall back to the fused XLA expression for now.
        return _contrastive_jnp(out0, out1, label, margin)

    if block_rows is not None:
        TB = int(block_rows)
    else:
        TB = max(8, min(tb_vmem, tb_target))
        if rows >= 16:
            # >= 2 grid steps so both v7x TensorCores get work ("parallel" grid axis).
            TB = min(TB, (((rows + 1) // 2) + 7) // 8 * 8)
    if TB >= rows:
        TB = rows                                            # single tile == full extent
    else:
        TB = max(8, (TB // 8) * 8)                           # sublane-aligned tile

    grid = (pl.cdiv(rows, TB),)                              # ragged last tile handled by Pallas

    x0 = out0.reshape(rows, Fp)                              # free contiguous reshape
    x1 = out1.reshape(rows, Fp)
    gt = label.astype(jnp.float32).reshape(rows, k)

    cost = pl.CostEstimate(
        flops=4 * B * F + 8 * B,
        transcendentals=B,
        bytes_accessed=2 * B * F * itemsize + 2 * B * 4,
    )

    loss = pl.pallas_call(
        functools.partial(_contrastive_kernel, k=k, feat=F, margin=float(margin)),
        out_shape=jax.ShapeDtypeStruct((rows, k), jnp.float32),
        grid=grid,
        in_specs=[
            pl.BlockSpec((TB, Fp), lambda i: (i, 0)),        # out0 tile (full packed F)
            pl.BlockSpec((TB, Fp), lambda i: (i, 0)),        # out1 tile
            pl.BlockSpec((TB, k), lambda i: (i, 0)),         # labels
        ],
        out_specs=pl.BlockSpec((TB, k), lambda i: (i, 0)),
        compiler_params=pltpu.CompilerParams(
            dimension_semantics=("parallel",),               # megacore-shard on v7x
            vmem_limit_bytes=int(vmem_limit),
        ),
        cost_estimate=cost,
    )(x0, x1, gt)

    # torch .squeeze(): per-sample loss of shape (B,). Row-major flatten of the
    # packed (rows, k) layout restores the original sample order.
    return loss.reshape(-1)


if __name__ == "__main__":
    key = jax.random.PRNGKey(0)
    k0, k1, k2 = jax.random.split(key, 3)

    def check(B, F, dtype=jnp.float32, block_rows=None, force=True, tol=1e-5):
        o0 = jax.random.normal(k0, (B, F), dtype=jnp.float32).astype(dtype)
        o1 = jax.random.normal(k1, (B, F), dtype=jnp.float32).astype(dtype)
        lb = jax.random.bernoulli(k2, 0.5, (B,)).astype(jnp.int32)
        got = contrastive_loss(o0, o1, lb, margin=0.5,
                               force_pallas=force, block_rows=block_rows)
        jax.block_until_ready(got)
        ref = _contrastive_jnp(o0, o1, lb, margin=0.5)
        assert got.shape == (B,), (got.shape, B)
        assert jnp.allclose(got, ref, atol=tol, rtol=tol), (B, F, str(dtype))
        return got

    # Small module-consistent shape: batch=8, hidden=32 -> lane-packed path (k=4).
    check(8, 32)
    # Multi-tile grid + ragged last tile on the packed path (no wrapper padding).
    check(40, 32, block_rows=8)
    # Unpacked path (F >= 128), multi-tile, batch not a multiple of the tile or of 8.
    check(100, 128, block_rows=32)
    # bf16 inputs stream at native width; in-kernel f32 cast validated vs reference.
    check(64, 256, dtype=jnp.bfloat16, tol=1e-4)
    # Larger shape exercises automatic tile sizing and the >=2-step (megacore) rule.
    check(512, 512, force=False)

    print("KERNEL_OK")
</pallas_src>

<mosaic_0001>
module attributes {stable_mosaic.version = 11 : i64} {
  func.func @_contrastive_kernel(%arg0: i32, %arg1: memref<2x128xf32, #tpu.memory_space<vmem>>, %arg2: memref<2x128xf32, #tpu.memory_space<vmem>>, %arg3: memref<2x4xf32, #tpu.memory_space<vmem>>, %arg4: memref<2x4xf32, #tpu.memory_space<vmem>>) attributes {dimension_semantics = [#tpu.dimension_semantics<parallel>], iteration_bounds = array<i64: 1>, scalar_prefetch = 0 : i64, scratch_operands = 0 : i64, tpu.core_type = #tpu.core_type<tc>, window_params = [{transform_indices = @transform_0, window_bounds = array<i64: 2, 128>}, {transform_indices = @transform_1, window_bounds = array<i64: 2, 128>}, {transform_indices = @transform_2, window_bounds = array<i64: 2, 4>}, {transform_indices = @transform_3, window_bounds = array<i64: 2, 4>}]} {
    %c0 = arith.constant 0 : index
    %c0_0 = arith.constant 0 : index
    %0 = vector.load %arg1[%c0, %c0_0] : memref<2x128xf32, #tpu.memory_space<vmem>>, vector<2x128xf32>
    %c0_1 = arith.constant 0 : index
    %c0_2 = arith.constant 0 : index
    %1 = vector.load %arg2[%c0_1, %c0_2] : memref<2x128xf32, #tpu.memory_space<vmem>>, vector<2x128xf32>
    %2 = arith.subf %0, %1 : vector<2x128xf32>
    %cst = arith.constant 9.99999997E-7 : f32
    %3 = vector.broadcast %cst : f32 to vector<2x128xf32>
    %4 = arith.addf %2, %3 : vector<2x128xf32>
    %5 = arith.mulf %4, %4 : vector<2x128xf32>
    %6 = vector.extract_strided_slice %5 {offsets = [0, 0], sizes = [2, 32], strides = [1, 1]} : vector<2x128xf32> to vector<2x32xf32>
    %cst_3 = arith.constant dense<0.000000e+00> : vector<2xf32>
    %7 = vector.multi_reduction <add>, %6, %cst_3 [1] : vector<2x32xf32> to vector<2xf32>
    %8 = vector.shape_cast %7 : vector<2xf32> to vector<2x1xf32>
    %9 = vector.extract_strided_slice %5 {offsets = [0, 32], sizes = [2, 32], strides = [1, 1]} : vector<2x128xf32> to vector<2x32xf32>
    %cst_4 = arith.constant dense<0.000000e+00> : vector<2xf32>
    %10 = vector.multi_reduction <add>, %9, %cst_4 [1] : vector<2x32xf32> to vector<2xf32>
    %11 = vector.shape_cast %10 : vector<2xf32> to vector<2x1xf32>
    %12 = vector.extract_strided_slice %5 {offsets = [0, 64], sizes = [2, 32], strides = [1, 1]} : vector<2x128xf32> to vector<2x32xf32>
    %cst_5 = arith.constant dense<0.000000e+00> : vector<2xf32>
    %13 = vector.multi_reduction <add>, %12, %cst_5 [1] : vector<2x32xf32> to vector<2xf32>
    %14 = vector.shape_cast %13 : vector<2xf32> to vector<2x1xf32>
    %15 = vector.extract_strided_slice %5 {offsets = [0, 96], sizes = [2, 32], strides = [1, 1]} : vector<2x128xf32> to vector<2x32xf32>
    %cst_6 = arith.constant dense<0.000000e+00> : vector<2xf32>
    %16 = vector.multi_reduction <add>, %15, %cst_6 [1] : vector<2x32xf32> to vector<2xf32>
    %17 = vector.shape_cast %16 : vector<2xf32> to vector<2x1xf32>
    %18 = tpu.concatenate %8, %11, %14, %17 in 1 : vector<2x1xf32>, vector<2x1xf32>, vector<2x1xf32>, vector<2x1xf32> -> vector<2x4xf32>
    %19 = math.sqrt %18 : vector<2x4xf32>
    %c0_7 = arith.constant 0 : index
    %c0_8 = arith.constant 0 : index
    %20 = vector.load %arg3[%c0_7, %c0_8] : memref<2x4xf32, #tpu.memory_space<vmem>>, vector<2x4xf32>
    %cst_9 = arith.constant 5.000000e-01 : f32
    %21 = vector.broadcast %cst_9 : f32 to vector<2x4xf32>
    %22 = arith.subf %21, %19 : vector<2x4xf32>
    %cst_10 = arith.constant 0.000000e+00 : f32
    %23 = vector.broadcast %cst_10 : f32 to vector<2x4xf32>
    %24 = arith.maximumf %22, %23 : vector<2x4xf32>
    %cst_11 = arith.constant 1.000000e+00 : f32
    %25 = vector.broadcast %cst_11 : f32 to vector<2x4xf32>
    %26 = arith.subf %25, %20 : vector<2x4xf32>
    %cst_12 = arith.constant 5.000000e-01 : f32
    %27 = vector.broadcast %cst_12 : f32 to vector<2x4xf32>
    %28 = arith.mulf %26, %27 : vector<2x4xf32>
    %29 = arith.mulf %28, %18 : vector<2x4xf32>
    %cst_13 = arith.constant 5.000000e-01 : f32
    %30 = vector.broadcast %cst_13 : f32 to vector<2x4xf32>
    %31 = arith.mulf %20, %30 : vector<2x4xf32>
    %32 = arith.mulf %24, %24 : vector<2x4xf32>
    %33 = arith.mulf %31, %32 : vector<2x4xf32>
    %34 = arith.addf %29, %33 : vector<2x4xf32>
    %c0_14 = arith.constant 0 : index
    %c0_15 = arith.constant 0 : index
    %35 = vector.load %arg4[%c0_14, %c0_15] : memref<2x4xf32, #tpu.memory_space<vmem>>, vector<2x4xf32>
    tpu.vector_store %arg4[%c0_14, %c0_15], %34 {strides = array<i32>} : memref<2x4xf32, #tpu.memory_space<vmem>>, vector<2x4xf32>,
    return
  }
  func.func @transform_0(%arg0: i32) -> (i32, i32) {
    %c0_i32 = arith.constant 0 : i32
    %c0_i32_0 = arith.constant 0 : i32
    return %arg0, %c0_i32 : i32, i32
  }
  func.func @transform_1(%arg0: i32) -> (i32, i32) {
    %c0_i32 = arith.constant 0 : i32
    %c0_i32_0 = arith.constant 0 : i32
    return %arg0, %c0_i32 : i32, i32
  }
  func.func @transform_2(%arg0: i32) -> (i32, i32) {
    %c0_i32 = arith.constant 0 : i32
    %c0_i32_0 = arith.constant 0 : i32
    return %arg0, %c0_i32 : i32, i32
  }
  func.func @transform_3(%arg0: i32) -> (i32, i32) {
    %c0_i32 = arith.constant 0 : i32
    %c0_i32_0 = arith.constant 0 : i32
    return %arg0, %c0_i32 : i32, i32
  }
}

</mosaic_0001>

<llo_original>
// kernel: tpu_custom_call.1
$region0: #{tpu_custom_call.1}
  #allocation0 [shape = 'u32[]', space=smem, size = 0x4, offset = 0x4, fixed_abs, tag = 'smem constant byte address 0x4 - core index']
  #allocation1 [shape = 'u32[72,128]{1,0:T(1,128)}', space=vmem, size = 0x9000, scoped, tag = 'internal scratch']
  %s0 = inlined_call_operand.hbm [shape: f32[2,128], index: 0, kind: input, shape index: {}]
  %s1 = inlined_call_operand.hbm [shape: f32[2,128], index: 1, kind: input, shape index: {}]
  %s2 = inlined_call_operand.hbm [shape: f32[2,4], index: 2, kind: input, shape index: {}]
  %s3 = inlined_call_operand.hbm [shape: f32[2,4], index: 3, kind: output, shape index: {}]
  %s4 = sld [smem:[#allocation0]]
  $region34: #{tpu_custom_call.1} parent=0
    _
  %s6 = ssub.s32 1, %s4
  %s7 = scalar_select 0, %s6, %s4
  $region1: #{tpu_custom_call.1} parent=0
    #allocation2 [shape = 'u8[1024]{0}', space=vmem, size = 0x400, scoped, tag = 'input window, operand 0, single buffered']
    #allocation3 [shape = 's32[1]{0}', space=sflag, size = 0x4, scoped, tag = 'scoped memory for tpu_custom_call.1']
    #allocation4 [shape = 's32[1]{0}', space=sflag, size = 0x4, scoped, tag = 'scoped memory for tpu_custom_call.1']
    #allocation5 [shape = 'u8[1024]{0}', space=vmem, size = 0x400, scoped, tag = 'input window, operand 1, single buffered']
    #allocation6 [shape = 's32[1]{0}', space=sflag, size = 0x4, scoped, tag = 'scoped memory for tpu_custom_call.1']
    #allocation7 [shape = 'u8[1024]{0}', space=vmem, size = 0x400, scoped, tag = 'input window, operand 2, single buffered']
    #allocation8 [shape = 'u8[1024]{0}', space=vmem, size = 0x400, scoped, tag = 'output window, operand 0, single buffered']
    %8 = vsyncpa [#allocation3], 0
    %9 = vsyncpa [#allocation6], 0
    %10 = vsyncpa [#allocation4], 0
    // Predicated region
    $region2: #{tpu_custom_call.1} parent=1 // pred_check
      _
    $region3: #{tpu_custom_call.1} parent=1 // pred_check_branch
      %12 = sbr.rel (0) target = $region5
    $region4: #{tpu_custom_call.1} parent=1 // pred_region
      %14 = vsyncadd [#allocation3], 0
      %s16 = sshll.u32 %s0, 4
      %s17 = int_to_ptr.hbm [resolvable:$true] %s16
      %s18 = sshll.u32 [#allocation2], 4
      %s19 = int_to_ptr.vmem [resolvable:$true] %s18
      %21 = dma.hbm_to_vmem [thread:$0]  %s17, 32, %s19, [#allocation3]
    $region5: #{tpu_custom_call.1} parent=1 // pred_fallthru
      _
    // Predicated region
    $region6: #{tpu_custom_call.1} parent=1 // pred_check
      _
    $region7: #{tpu_custom_call.1} parent=1 // pred_check_branch
      %23 = sbr.rel (0) target = $region9
    $region8: #{tpu_custom_call.1} parent=1 // pred_region
      %25 = vsyncadd [#allocation6], 0
      %s27 = sshll.u32 %s1, 4
      %s28 = int_to_ptr.hbm [resolvable:$true] %s27
      %s29 = sshll.u32 [#allocation5], 4
      %s30 = int_to_ptr.vmem [resolvable:$true] %s29
      %32 = dma.hbm_to_vmem [thread:$0]  %s28, 32, %s30, [#allocation6]
    $region9: #{tpu_custom_call.1} parent=1 // pred_fallthru
      _
    // Predicated region
    $region10: #{tpu_custom_call.1} parent=1 // pred_check
      _
    $region11: #{tpu_custom_call.1} parent=1 // pred_check_branch
      %34 = sbr.rel (0) target = $region13
    $region12: #{tpu_custom_call.1} parent=1 // pred_region
      %36 = vsyncadd [#allocation6], 0
      %s38 = sshll.u32 %s2, 4
      %s39 = int_to_ptr.hbm [resolvable:$true] %s38
      %s40 = sshll.u32 [#allocation7], 4
      %s41 = int_to_ptr.vmem [resolvable:$true] %s40
      %43 = dma.hbm_to_vmem [thread:$0]  %s39, 32, %s41, [#allocation6]
    $region13: #{tpu_custom_call.1} parent=1 // pred_fallthru
      _
    // Predicated region
    $region14: #{tpu_custom_call.1} parent=1 // pred_check
      _
    $region15: #{tpu_custom_call.1} parent=1 // pred_check_branch
      %45 = sbr.rel (0) target = $region17
    $region16: #{tpu_custom_call.1} parent=1 // pred_region
      %47 = dma.done [#allocation3], 32
    $region17: #{tpu_custom_call.1} parent=1 // pred_fallthru
      _
    // Predicated region
    $region18: #{tpu_custom_call.1} parent=1 // pred_check
      _
    $region19: #{tpu_custom_call.1} parent=1 // pred_check_branch
      %49 = sbr.rel (0) target = $region21
    $region20: #{tpu_custom_call.1} parent=1 // pred_region
      %51 = dma.done [#allocation6], 32
    $region21: #{tpu_custom_call.1} parent=1 // pred_fallthru
      _
    // Predicated region
    $region22: #{tpu_custom_call.1} parent=1 // pred_check
      _
    $region23: #{tpu_custom_call.1} parent=1 // pred_check_branch
      %53 = sbr.rel (0) target = $region25
    $region24: #{tpu_custom_call.1} parent=1 // pred_region
      %55 = dma.done [#allocation6], 32
    $region25: #{tpu_custom_call.1} parent=1 // pred_fallthru
      _
    %v56 = vld [vmem:[#allocation2] sm:$0x3]
    %v57 = vld [vmem:[#allocation5] sm:$0x3]
    %v58 = vsub.f32 %v56, %v57
    %v59 = vadd.f32 %v58, 1e-06
    %v60 = vmul.f32 %v59, %v59
    %vm61 = vcmask 254976
    %v62 = vsel %vm61, %v60, 0.0
    %63 = vadd.xlane.f32.xlu0 %v62
    %v64 = vpop.xlane.xlu0 %63
    %66 = vrot.lane.b32.xlu0 %v60, 96
    %v67 = vpop.permute.xlu0 %66
    %v69 = vsel %vm61, %v67, 0.0
    %70 = vadd.xlane.f32.xlu0 %v69
    %v71 = vpop.xlane.xlu0 %70
    %72 = vrot.lane.b32.xlu0 %v60, 64
    %v73 = vpop.permute.xlu0 %72
    %v75 = vsel %vm61, %v73, 0.0
    %76 = vadd.xlane.f32.xlu0 %v75
    %v77 = vpop.xlane.xlu0 %76
    %78 = vrot.lane.b32.xlu0 %v60, 32
    %v79 = vpop.permute.xlu0 %78
    %v81 = vsel %vm61, %v79, 0.0
    %82 = vadd.xlane.f32.xlu0 %v81
    %v83 = vpop.xlane.xlu0 %82
    %vm84 = vcmask 7168
    %v85 = vsel %vm84, %v64, %v71
    %vm86 = vcmask 15360
    %v87 = vsel %vm86, %v85, %v77
    %vm88 = vcmask 23552
    %v89 = vsel %vm88, %v87, %v83
    %v90 = vrsqrt.pop %v89
    %v91 = vmul.f32 %v90, %v89
    %v92 = vmul.f32 %v91, %v90
    %v93 = vmul.f32 0.5, %v92
    %v94 = vsub.f32 1.5, %v93
    %v95 = vmul.f32 %v90, %v94
    %v96 = vmul.f32 %v89, %v95
    %vm97 = vcmp.eq.f32.partialorder %v89, inf
    %v98 = vsel %vm97, %v89, %v96
    %vm99 = vcmp.eq.f32.partialorder %v89, 0.0
    %v100 = vand.u32 %v89, 2147483648
    %v101 = vsel %vm99, %v100, %v98
    %v102 = vld [vmem:[#allocation7] sm:$0x3]
    %v103 = vsub.f32 0.5, %v101
    %v104 = vmax.f32 %v103, 0.0
    %v105 = vsub.f32 1.0, %v102
    %v106 = vmul.f32 %v105, 0.5
    %v107 = vmul.f32 %v106, %v89
    %v108 = vmul.f32 %v102, 0.5
    %v109 = vmul.f32 %v104, %v104
    %v110 = vmul.f32 %v108, %v109
    %v111 = vadd.f32 %v107, %v110
    %vm112 = vcmask 25600
    %113 = vst.msk [vmem:[#allocation8] sm:$0x3] %vm112, %v111
    // Predicated region
    $region26: #{tpu_custom_call.1} parent=1 // pred_check
      _
    $region27: #{tpu_custom_call.1} parent=1 // pred_check_branch
      %115 = sbr.rel (0) target = $region29
    $region28: #{tpu_custom_call.1} parent=1 // pred_region
      %117 = vsyncadd [#allocation4], 0
      %s119 = sshll.u32 [#allocation8], 4
      %s120 = int_to_ptr.vmem [resolvable:$true] %s119
      %s121 = sshll.u32 %s3, 4
      %s122 = int_to_ptr.hbm [resolvable:$true] %s121
      %124 = dma.vmem_to_hbm [thread:$0]  %s120, 32, %s122, [#allocation4]
    $region29: #{tpu_custom_call.1} parent=1 // pred_fallthru
      _
    // Predicated region
    $region30: #{tpu_custom_call.1} parent=1 // pred_check
      _
    $region31: #{tpu_custom_call.1} parent=1 // pred_check_branch
      %126 = sbr.rel (0) target = $region33
    $region32: #{tpu_custom_call.1} parent=1 // pred_region
      %128 = dma.done [#allocation4], 32
    $region33: #{tpu_custom_call.1} parent=1 // pred_fallthru
      _
    %129 = vsyncpa [#allocation3], 1
    %130 = vsyncpa [#allocation6], 1
    %131 = vsyncpa [#allocation4], 1

</llo_original>
